<compile_context>
chip_gen: v6e
topology: v6e:2x2x1
jax: 0.10.0
libtpu: 0.0.40
codegen_flags: <defaults>
</compile_context>

<pallas_src>
import jax
import jax.numpy as jnp
from jax.experimental import pallas as pl
from jax.experimental.pallas import tpu as pltpu


def _round_up(n, m):
    return ((n + m - 1) // m) * m


def _cdiv(a, b):
    return -(-a // b)


def glu_ff_kernel(xc_ref, xh_ref, w_ref, b_ref, o_ref, win_ref, xcat_ref):
    """One (batch, L-tile) grid step.

    xc_ref:   (1, TL, D)        current sequence tile (compute dtype, e.g. bf16)
    xh_ref:   (1, HALO, D)      halo rows = first HALO rows of the next tile
    w_ref:    (K*D, 2*D)        fused per-tap value|gate weights (compute dtype)
    b_ref:    (1, 2*D) f32      fused value|gate bias
    o_ref:    (1, TL, D)        gated output tile
    win_ref:  (TL+HALO, D) f32  scratch: halo'd window (f32 so the K shifted per-tap
                                reads are plain 32-bit sublane slices)
    xcat_ref: (TL, K*D)         scratch: concatenated conv operand for the single matmul
    """
    TL = o_ref.shape[1]
    D = o_ref.shape[2]
    HALO = xh_ref.shape[1]
    K = xcat_ref.shape[1] // D
    mxu_dtype = w_ref.dtype

    # Assemble the halo'd window with aligned stores (TL is a multiple of 8).
    win_ref[pl.ds(0, TL), :] = xc_ref[0].astype(jnp.float32)
    win_ref[pl.ds(TL, HALO), :] = xh_ref[0].astype(jnp.float32)

    # Fold the K taps into the contraction dim: xcat[:, k*D:(k+1)*D] = window[k : k+TL].
    # K is small & static -> unrolled lane-block stores; no per-tap accumulator RMW.
    for k in range(K):
        xcat_ref[:, k * D:(k + 1) * D] = win_ref[pl.ds(k, TL), :].astype(mxu_dtype)

    # Single MXU matmul per tile: (TL, K*D) @ (K*D, 2D) with f32 accumulation.
    acc = jnp.dot(xcat_ref[...], w_ref[...], preferred_element_type=jnp.float32)
    acc = acc + b_ref[...]                               # (TL, 2D) + (1, 2D)

    # GLU: value = first D channels, gate = last D channels (== torch.chunk(dim=1)).
    val = acc[:, :D]
    gate = acc[:, D:]
    # sigmoid(g) = 1 / (1 + exp(-g)); approx reciprocal runs on the EUP slot (near-free).
    sig = pl.reciprocal(1.0 + jnp.exp(-gate), approx=True)
    o_ref[0] = (val * sig).astype(o_ref.dtype)


def pack_glu_params(weight, bias, *, compute_dtype=jnp.bfloat16):
    """Repack PyTorch Conv1d params once (hoisted out of the per-forward wrapper).

    weight: (2*D, D, K) — PyTorch Conv1d (out_channels, in_channels, K) layout.
    bias:   (2*D,)
    Returns (w_packed (K*D, 2*D) compute_dtype, b_packed (1, 2*D) f32).
    """
    two_d, d, k = weight.shape
    w_packed = jnp.transpose(weight, (2, 1, 0)).reshape(k * d, two_d).astype(compute_dtype)
    b_packed = bias.reshape(1, two_d).astype(jnp.float32)
    return w_packed, b_packed


def glu_feedforward(x, w_packed, b_packed, kernel_size=5, *, block_l=512):
    """x: (B, L, D) channels-last. w_packed/b_packed from pack_glu_params()."""
    B, L, D = x.shape
    K = kernel_size
    pad = K // 2
    compute_dtype = w_packed.dtype
    assert w_packed.shape == (K * D, 2 * D)

    halo = max(8, _round_up(K - 1, 8))               # >= K-1 rows, sublane aligned
    TL = _round_up(min(block_l, _round_up(L, halo)), halo)

    cb = jnp.dtype(compute_dtype).itemsize
    ob = jnp.dtype(x.dtype).itemsize

    def est_bytes(tl, wbuf):
        # wbuf = buffer count used for the constant (weight / bias) blocks.
        return (wbuf * (K * D * 2 * D * cb + 2 * D * 4)    # resident weights + bias
                + 2 * (tl + halo) * D * cb                 # pipelined x tile + halo
                + 2 * tl * D * ob                          # pipelined out tiles
                + (tl + halo) * D * 4                      # f32 window scratch
                + tl * K * D * cb                          # concat operand scratch
                + tl * 2 * D * 4)                          # f32 matmul result

    # Generation-aware VMEM budget (v5e/v6e: 128 MiB, v7x: 64 MiB per TensorCore).
    try:
        vmem_cap = int(pltpu.get_tpu_info().vmem_capacity_bytes)
    except Exception:
        vmem_cap = 64 * 1024 * 1024                  # conservative fallback, valid on v7x
    budget = max(int(vmem_cap * 0.9), 32 * 1024 * 1024)

    # Shrink the L tile until the estimate fits (estimate assumes single-buffered weights,
    # consistent with the Buffered(1) specs below).
    while TL > halo and est_bytes(TL, 1) > budget:
        TL = _round_up(TL // 2, halo)

    # v7x two-TC balance: if B == 1 prefer an even number of L tiles.
    if B == 1 and _cdiv(L, TL) > 1 and _cdiv(L, TL) % 2 == 1:
        cand = _round_up(_cdiv(L, _cdiv(L, TL) + 1), halo)
        if cand >= halo and _cdiv(L, cand) % 2 == 0:
            TL = cand

    nL = _cdiv(L, TL)
    Lp = nL * TL + halo                              # padded length incl. trailing halo

    # 'same' zero padding + trailing halo padding, done once in the wrapper (bf16 copy so
    # the kernel-side DMA traffic is half-width).
    x_c = x.astype(compute_dtype)
    x_pad = jnp.pad(x_c, ((0, 0), (pad, Lp - pad - L), (0, 0)))   # (B, Lp, D)

    def run(wbuf):
        const_kw = {"pipeline_mode": pl.Buffered(1)} if wbuf == 1 else {}
        in_specs = [
            pl.BlockSpec((1, TL, D), lambda b, l: (b, l, 0)),               # x tile
            pl.BlockSpec((1, halo, D),
                         lambda b, l: (b, (l + 1) * (TL // halo), 0)),      # halo rows
            pl.BlockSpec((K * D, 2 * D), lambda b, l: (0, 0), **const_kw),  # fused weights
            pl.BlockSpec((1, 2 * D), lambda b, l: (0, 0), **const_kw),      # fused bias
        ]
        out_specs = pl.BlockSpec((1, TL, D), lambda b, l: (b, l, 0))
        est = est_bytes(TL, wbuf)
        vmem_limit = int(min(max(est + est // 4, 32 * 1024 * 1024), budget))
        return pl.pallas_call(
            glu_ff_kernel,
            out_shape=jax.ShapeDtypeStruct((B, nL * TL, D), x.dtype),
            grid_spec=pltpu.PrefetchScalarGridSpec(
                num_scalar_prefetch=0,
                grid=(B, nL),
                in_specs=in_specs,
                out_specs=out_specs,
                scratch_shapes=[
                    pltpu.VMEM((TL + halo, D), jnp.float32),     # halo'd window
                    pltpu.VMEM((TL, K * D), compute_dtype),      # concat conv operand
                ]),
            compiler_params=pltpu.CompilerParams(
                dimension_semantics=("parallel", "parallel"),
                vmem_limit_bytes=vmem_limit),
        )(x_pad, x_pad, w_packed, b_packed)

    try:
        out = run(1)      # single-buffer the constant weight/bias blocks (VMEM relief)
    except Exception:
        out = run(2)      # pl.Buffered(1) unsupported -> default double buffering

    if nL * TL != L:
        out = out[:, :L, :]
    return out


def glu_feedforward_ref(x, weight, bias, kernel_size=5):
    """Pure-JAX f32 reference matching the PyTorch forward (eval mode)."""
    B, L, D = x.shape
    K = kernel_size
    pad = K // 2
    x_pad = jnp.pad(x, ((0, 0), (pad, pad), (0, 0)))              # (B, L+K-1, D)
    w_taps = jnp.transpose(weight, (2, 1, 0))                     # (K, D, 2D)
    acc = jnp.zeros((B, L, 2 * D), jnp.float32)
    for k in range(K):
        acc = acc + jnp.einsum("bld,de->ble", x_pad[:, k:k + L, :], w_taps[k])
    acc = acc + bias[None, None, :]
    val, gate = acc[..., :D], acc[..., D:]
    return val * jax.nn.sigmoid(gate)


if __name__ == "__main__":
    d_model = 32
    kernel_size = 5
    B, L = 2, 8

    key = jax.random.PRNGKey(0)
    kx, kw, kb = jax.random.split(key, 3)

    x = jax.random.normal(kx, (B, L, d_model), dtype=jnp.float32)
    # Conv1d weight shape (out_channels=2*d_model, in_channels=d_model, K)
    fan_in = d_model * kernel_size
    bound = 1.0 / (fan_in ** 0.5)
    weight = jax.random.uniform(kw, (2 * d_model, d_model, kernel_size),
                                minval=-bound, maxval=bound, dtype=jnp.float32)
    bias = jax.random.uniform(kb, (2 * d_model,),
                              minval=-bound, maxval=bound, dtype=jnp.float32)

    # Weight repack hoisted out of the forward call (done once per parameter set).
    w_packed, b_packed = pack_glu_params(weight, bias)

    out = glu_feedforward(x, w_packed, b_packed, kernel_size)
    out = jax.block_until_ready(out)

    ref = glu_feedforward_ref(x, weight, bias, kernel_size)
    assert out.shape == (B, L, d_model)
    assert out.dtype == x.dtype
    # bf16 matmul operands (f32 accumulation) + approx reciprocal -> loosened tolerance.
    assert jnp.allclose(out, ref, atol=3e-2, rtol=3e-2), float(
        jnp.max(jnp.abs(out - ref)))

    print("KERNEL_OK")
</pallas_src>

<mosaic_0001>
module attributes {stable_mosaic.version = 11 : i64} {
  func.func @glu_ff_kernel(%arg0: i32, %arg1: i32, %arg2: memref<1x8x32xbf16, #tpu.memory_space<vmem>>, %arg3: memref<1x8x32xbf16, #tpu.memory_space<vmem>>, %arg4: memref<160x64xbf16, #tpu.memory_space<vmem>>, %arg5: memref<1x64xf32, #tpu.memory_space<vmem>>, %arg6: memref<1x8x32xf32, #tpu.memory_space<vmem>>, %arg7: memref<16x32xf32, #tpu.memory_space<vmem>>, %arg8: memref<8x160xbf16, #tpu.memory_space<vmem>>) attributes {dimension_semantics = [#tpu.dimension_semantics<parallel>, #tpu.dimension_semantics<parallel>], iteration_bounds = array<i64: 2, 1>, scalar_prefetch = 0 : i64, scratch_operands = 2 : i64, tpu.core_type = #tpu.core_type<tc>, window_params = [{transform_indices = @transform_0, window_bounds = array<i64: 1, 8, 32>}, {transform_indices = @transform_1, window_bounds = array<i64: 1, 8, 32>}, {pipeline_mode = #tpu.pipeline_mode<synchronous>, transform_indices = @transform_2, window_bounds = array<i64: 160, 64>}, {pipeline_mode = #tpu.pipeline_mode<synchronous>, transform_indices = @transform_3, window_bounds = array<i64: 1, 64>}, {transform_indices = @transform_4, window_bounds = array<i64: 1, 8, 32>}]} {
    %c0 = arith.constant 0 : index
    %c0_0 = arith.constant 0 : index
    %c0_1 = arith.constant 0 : index
    %0 = vector.load %arg2[%c0, %c0_0, %c0_1] : memref<1x8x32xbf16, #tpu.memory_space<vmem>>, vector<1x8x32xbf16>
    %1 = vector.shape_cast %0 : vector<1x8x32xbf16> to vector<8x32xbf16>
    %2 = arith.extf %1 : vector<8x32xbf16> to vector<8x32xf32>
    %c0_2 = arith.constant 0 : index
    %c0_3 = arith.constant 0 : index
    %3 = vector.load %arg7[%c0_2, %c0_3] : memref<16x32xf32, #tpu.memory_space<vmem>>, vector<8x32xf32>
    tpu.vector_store %arg7[%c0_2, %c0_3], %2 {strides = array<i32>} : memref<16x32xf32, #tpu.memory_space<vmem>>, vector<8x32xf32>,
    %c0_4 = arith.constant 0 : index
    %c0_5 = arith.constant 0 : index
    %c0_6 = arith.constant 0 : index
    %4 = vector.load %arg3[%c0_4, %c0_5, %c0_6] : memref<1x8x32xbf16, #tpu.memory_space<vmem>>, vector<1x8x32xbf16>
    %5 = vector.shape_cast %4 : vector<1x8x32xbf16> to vector<8x32xbf16>
    %6 = arith.extf %5 : vector<8x32xbf16> to vector<8x32xf32>
    %c8 = arith.constant 8 : index
    %c0_7 = arith.constant 0 : index
    %7 = vector.load %arg7[%c8, %c0_7] : memref<16x32xf32, #tpu.memory_space<vmem>>, vector<8x32xf32>
    tpu.vector_store %arg7[%c8, %c0_7], %6 {strides = array<i32>} : memref<16x32xf32, #tpu.memory_space<vmem>>, vector<8x32xf32>,
    %c0_8 = arith.constant 0 : index
    %c0_9 = arith.constant 0 : index
    %8 = vector.load %arg7[%c0_8, %c0_9] : memref<16x32xf32, #tpu.memory_space<vmem>>, vector<8x32xf32>
    %9 = arith.truncf %8 : vector<8x32xf32> to vector<8x32xbf16>
    %c0_10 = arith.constant 0 : index
    %c0_11 = arith.constant 0 : index
    %10 = vector.load %arg8[%c0_10, %c0_11] : memref<8x160xbf16, #tpu.memory_space<vmem>>, vector<8x32xbf16>
    tpu.vector_store %arg8[%c0_10, %c0_11], %9 {strides = array<i32>} : memref<8x160xbf16, #tpu.memory_space<vmem>>, vector<8x32xbf16>,
    %c1 = arith.constant 1 : index
    %c0_12 = arith.constant 0 : index
    %11 = vector.load %arg7[%c1, %c0_12] : memref<16x32xf32, #tpu.memory_space<vmem>>, vector<8x32xf32>
    %12 = arith.truncf %11 : vector<8x32xf32> to vector<8x32xbf16>
    %c0_13 = arith.constant 0 : index
    %c32 = arith.constant 32 : index
    %13 = vector.load %arg8[%c0_13, %c32] : memref<8x160xbf16, #tpu.memory_space<vmem>>, vector<8x32xbf16>
    tpu.vector_store %arg8[%c0_13, %c32], %12 {strides = array<i32>} : memref<8x160xbf16, #tpu.memory_space<vmem>>, vector<8x32xbf16>,
    %c2 = arith.constant 2 : index
    %c0_14 = arith.constant 0 : index
    %14 = vector.load %arg7[%c2, %c0_14] : memref<16x32xf32, #tpu.memory_space<vmem>>, vector<8x32xf32>
    %15 = arith.truncf %14 : vector<8x32xf32> to vector<8x32xbf16>
    %c0_15 = arith.constant 0 : index
    %c64 = arith.constant 64 : index
    %16 = vector.load %arg8[%c0_15, %c64] : memref<8x160xbf16, #tpu.memory_space<vmem>>, vector<8x32xbf16>
    tpu.vector_store %arg8[%c0_15, %c64], %15 {strides = array<i32>} : memref<8x160xbf16, #tpu.memory_space<vmem>>, vector<8x32xbf16>,
    %c3 = arith.constant 3 : index
    %c0_16 = arith.constant 0 : index
    %17 = vector.load %arg7[%c3, %c0_16] : memref<16x32xf32, #tpu.memory_space<vmem>>, vector<8x32xf32>
    %18 = arith.truncf %17 : vector<8x32xf32> to vector<8x32xbf16>
    %c0_17 = arith.constant 0 : index
    %c96 = arith.constant 96 : index
    %19 = vector.load %arg8[%c0_17, %c96] : memref<8x160xbf16, #tpu.memory_space<vmem>>, vector<8x32xbf16>
    tpu.vector_store %arg8[%c0_17, %c96], %18 {strides = array<i32>} : memref<8x160xbf16, #tpu.memory_space<vmem>>, vector<8x32xbf16>,
    %c4 = arith.constant 4 : index
    %c0_18 = arith.constant 0 : index
    %20 = vector.load %arg7[%c4, %c0_18] : memref<16x32xf32, #tpu.memory_space<vmem>>, vector<8x32xf32>
    %21 = arith.truncf %20 : vector<8x32xf32> to vector<8x32xbf16>
    %c0_19 = arith.constant 0 : index
    %c128 = arith.constant 128 : index
    %22 = vector.load %arg8[%c0_19, %c128] : memref<8x160xbf16, #tpu.memory_space<vmem>>, vector<8x32xbf16>
    tpu.vector_store %arg8[%c0_19, %c128], %21 {strides = array<i32>} : memref<8x160xbf16, #tpu.memory_space<vmem>>, vector<8x32xbf16>,
    %c0_20 = arith.constant 0 : index
    %c0_21 = arith.constant 0 : index
    %23 = vector.load %arg8[%c0_20, %c0_21] : memref<8x160xbf16, #tpu.memory_space<vmem>>, vector<8x160xbf16>
    %c0_22 = arith.constant 0 : index
    %c0_23 = arith.constant 0 : index
    %24 = vector.load %arg4[%c0_22, %c0_23] : memref<160x64xbf16, #tpu.memory_space<vmem>>, vector<160x64xbf16>
    %cst = arith.constant dense<0.000000e+00> : vector<8x64xf32>
    %25 = tpu.matmul %23, %24, %cst {dimension_numbers = #tpu.dot_dimension_numbers<[1], [0], [0], [1], [0, 0, 1, 1], [], []>} : vector<8x160xbf16>, vector<160x64xbf16>, vector<8x64xf32> -> vector<8x64xf32>
    %c0_24 = arith.constant 0 : index
    %c0_25 = arith.constant 0 : index
    %26 = vector.load %arg5[%c0_24, %c0_25] : memref<1x64xf32, #tpu.memory_space<vmem>>, vector<1x64xf32>
    %27 = vector.broadcast %26 : vector<1x64xf32> to vector<8x64xf32>
    %28 = arith.addf %25, %27 : vector<8x64xf32>
    %29 = vector.extract_strided_slice %28 {offsets = [0, 0], sizes = [8, 32], strides = [1, 1]} : vector<8x64xf32> to vector<8x32xf32>
    %30 = vector.extract_strided_slice %28 {offsets = [0, 32], sizes = [8, 32], strides = [1, 1]} : vector<8x64xf32> to vector<8x32xf32>
    %cst_26 = arith.constant 0.000000e+00 : f32
    %31 = vector.broadcast %cst_26 : f32 to vector<8x32xf32>
    %32 = arith.subf %31, %30 : vector<8x32xf32>
    %33 = math.exp %32 : vector<8x32xf32>
    %cst_27 = arith.constant 1.000000e+00 : f32
    %34 = vector.broadcast %cst_27 : f32 to vector<8x32xf32>
    %35 = arith.addf %34, %33 : vector<8x32xf32>
    %36 = tpu.reciprocal %35 {approx = true} : vector<8x32xf32> -> vector<8x32xf32>
    %37 = arith.mulf %29, %36 : vector<8x32xf32>
    %c0_28 = arith.constant 0 : index
    %c0_29 = arith.constant 0 : index
    %c0_30 = arith.constant 0 : index
    %38 = vector.load %arg6[%c0_28, %c0_29, %c0_30] : memref<1x8x32xf32, #tpu.memory_space<vmem>>, vector<1x8x32xf32>
    %39 = vector.shape_cast %38 : vector<1x8x32xf32> to vector<8x32xf32>
    %40 = vector.shape_cast %37 : vector<8x32xf32> to vector<1x8x32xf32>
    tpu.vector_store %arg6[%c0_28, %c0_29, %c0_30], %40 {strides = array<i32>} : memref<1x8x32xf32, #tpu.memory_space<vmem>>, vector<1x8x32xf32>,
    return
  }
  func.func @transform_0(%arg0: i32, %arg1: i32) -> (i32, i32, i32) {
    %c0_i32 = arith.constant 0 : i32
    %c0_i32_0 = arith.constant 0 : i32
    return %arg0, %arg1, %c0_i32 : i32, i32, i32
  }
  func.func @transform_1(%arg0: i32, %arg1: i32) -> (i32, i32, i32) {
    %c1_i32 = arith.constant 1 : i32
    %0 = arith.addi %arg1, %c1_i32 : i32
    %c1_i32_0 = arith.constant 1 : i32
    %1 = arith.muli %0, %c1_i32_0 : i32
    %c0_i32 = arith.constant 0 : i32
    %c0_i32_1 = arith.constant 0 : i32
    return %arg0, %1, %c0_i32 : i32, i32, i32
  }
  func.func @transform_2(%arg0: i32, %arg1: i32) -> (i32, i32) {
    %c0_i32 = arith.constant 0 : i32
    %c0_i32_0 = arith.constant 0 : i32
    %c0_i32_1 = arith.constant 0 : i32
    return %c0_i32, %c0_i32_0 : i32, i32
  }
  func.func @transform_3(%arg0: i32, %arg1: i32) -> (i32, i32) {
    %c0_i32 = arith.constant 0 : i32
    %c0_i32_0 = arith.constant 0 : i32
    %c0_i32_1 = arith.constant 0 : i32
    return %c0_i32, %c0_i32_0 : i32, i32
  }
  func.func @transform_4(%arg0: i32, %arg1: i32) -> (i32, i32, i32) {
    %c0_i32 = arith.constant 0 : i32
    %c0_i32_0 = arith.constant 0 : i32
    return %arg0, %arg1, %c0_i32 : i32, i32, i32
  }
}

module attributes {stable_mosaic.version = 11 : i64} {
  func.func @glu_ff_kernel(%arg0: i32, %arg1: i32, %arg2: memref<1x8x32xbf16, #tpu.memory_space<vmem>>, %arg3: memref<1x8x32xbf16, #tpu.memory_space<vmem>>, %arg4: memref<160x64xbf16, #tpu.memory_space<vmem>>, %arg5: memref<1x64xf32, #tpu.memory_space<vmem>>, %arg6: memref<1x8x32xf32, #tpu.memory_space<vmem>>, %arg7: memref<16x32xf32, #tpu.memory_space<vmem>>, %arg8: memref<8x160xbf16, #tpu.memory_space<vmem>>) attributes {dimension_semantics = [#tpu.dimension_semantics<parallel>, #tpu.dimension_semantics<parallel>], iteration_bounds = array<i64: 2, 1>, scalar_prefetch = 0 : i64, scratch_operands = 2 : i64, tpu.core_type = #tpu.core_type<tc>, window_params = [{transform_indices = @transform_0, window_bounds = array<i64: 1, 8, 32>}, {transform_indices = @transform_1, window_bounds = array<i64: 1, 8, 32>}, {pipeline_mode = #tpu.pipeline_mode<synchronous>, transform_indices = @transform_2, window_bounds = array<i64: 160, 64>}, {pipeline_mode = #tpu.pipeline_mode<synchronous>, transform_indices = @transform_3, window_bounds = array<i64: 1, 64>}, {transform_indices = @transform_4, window_bounds = array<i64: 1, 8, 32>}]} {
    %c0 = arith.constant 0 : index
    %c0_0 = arith.constant 0 : index
    %c0_1 = arith.constant 0 : index
    %0 = vector.load %arg2[%c0, %c0_0, %c0_1] : memref<1x8x32xbf16, #tpu.memory_space<vmem>>, vector<1x8x32xbf16>
    %1 = vector.shape_cast %0 : vector<1x8x32xbf16> to vector<8x32xbf16>
    %2 = arith.extf %1 : vector<8x32xbf16> to vector<8x32xf32>
    %c0_2 = arith.constant 0 : index
    %c0_3 = arith.constant 0 : index
    %3 = vector.load %arg7[%c0_2, %c0_3] : memref<16x32xf32, #tpu.memory_space<vmem>>, vector<8x32xf32>
    tpu.vector_store %arg7[%c0_2, %c0_3], %2 {strides = array<i32>} : memref<16x32xf32, #tpu.memory_space<vmem>>, vector<8x32xf32>,
    %c0_4 = arith.constant 0 : index
    %c0_5 = arith.constant 0 : index
    %c0_6 = arith.constant 0 : index
    %4 = vector.load %arg3[%c0_4, %c0_5, %c0_6] : memref<1x8x32xbf16, #tpu.memory_space<vmem>>, vector<1x8x32xbf16>
    %5 = vector.shape_cast %4 : vector<1x8x32xbf16> to vector<8x32xbf16>
    %6 = arith.extf %5 : vector<8x32xbf16> to vector<8x32xf32>
    %c8 = arith.constant 8 : index
    %c0_7 = arith.constant 0 : index
    %7 = vector.load %arg7[%c8, %c0_7] : memref<16x32xf32, #tpu.memory_space<vmem>>, vector<8x32xf32>
    tpu.vector_store %arg7[%c8, %c0_7], %6 {strides = array<i32>} : memref<16x32xf32, #tpu.memory_space<vmem>>, vector<8x32xf32>,
    %c0_8 = arith.constant 0 : index
    %c0_9 = arith.constant 0 : index
    %8 = vector.load %arg7[%c0_8, %c0_9] : memref<16x32xf32, #tpu.memory_space<vmem>>, vector<8x32xf32>
    %9 = arith.truncf %8 : vector<8x32xf32> to vector<8x32xbf16>
    %c0_10 = arith.constant 0 : index
    %c0_11 = arith.constant 0 : index
    %10 = vector.load %arg8[%c0_10, %c0_11] : memref<8x160xbf16, #tpu.memory_space<vmem>>, vector<8x32xbf16>
    tpu.vector_store %arg8[%c0_10, %c0_11], %9 {strides = array<i32>} : memref<8x160xbf16, #tpu.memory_space<vmem>>, vector<8x32xbf16>,
    %c1 = arith.constant 1 : index
    %c0_12 = arith.constant 0 : index
    %11 = vector.load %arg7[%c1, %c0_12] : memref<16x32xf32, #tpu.memory_space<vmem>>, vector<8x32xf32>
    %12 = arith.truncf %11 : vector<8x32xf32> to vector<8x32xbf16>
    %c0_13 = arith.constant 0 : index
    %c32 = arith.constant 32 : index
    %13 = vector.load %arg8[%c0_13, %c32] : memref<8x160xbf16, #tpu.memory_space<vmem>>, vector<8x32xbf16>
    tpu.vector_store %arg8[%c0_13, %c32], %12 {strides = array<i32>} : memref<8x160xbf16, #tpu.memory_space<vmem>>, vector<8x32xbf16>,
    %c2 = arith.constant 2 : index
    %c0_14 = arith.constant 0 : index
    %14 = vector.load %arg7[%c2, %c0_14] : memref<16x32xf32, #tpu.memory_space<vmem>>, vector<8x32xf32>
    %15 = arith.truncf %14 : vector<8x32xf32> to vector<8x32xbf16>
    %c0_15 = arith.constant 0 : index
    %c64 = arith.constant 64 : index
    %16 = vector.load %arg8[%c0_15, %c64] : memref<8x160xbf16, #tpu.memory_space<vmem>>, vector<8x32xbf16>
    tpu.vector_store %arg8[%c0_15, %c64], %15 {strides = array<i32>} : memref<8x160xbf16, #tpu.memory_space<vmem>>, vector<8x32xbf16>,
    %c3 = arith.constant 3 : index
    %c0_16 = arith.constant 0 : index
    %17 = vector.load %arg7[%c3, %c0_16] : memref<16x32xf32, #tpu.memory_space<vmem>>, vector<8x32xf32>
    %18 = arith.truncf %17 : vector<8x32xf32> to vector<8x32xbf16>
    %c0_17 = arith.constant 0 : index
    %c96 = arith.constant 96 : index
    %19 = vector.load %arg8[%c0_17, %c96] : memref<8x160xbf16, #tpu.memory_space<vmem>>, vector<8x32xbf16>
    tpu.vector_store %arg8[%c0_17, %c96], %18 {strides = array<i32>} : memref<8x160xbf16, #tpu.memory_space<vmem>>, vector<8x32xbf16>,
    %c4 = arith.constant 4 : index
    %c0_18 = arith.constant 0 : index
    %20 = vector.load %arg7[%c4, %c0_18] : memref<16x32xf32, #tpu.memory_space<vmem>>, vector<8x32xf32>
    %21 = arith.truncf %20 : vector<8x32xf32> to vector<8x32xbf16>
    %c0_19 = arith.constant 0 : index
    %c128 = arith.constant 128 : index
    %22 = vector.load %arg8[%c0_19, %c128] : memref<8x160xbf16, #tpu.memory_space<vmem>>, vector<8x32xbf16>
    tpu.vector_store %arg8[%c0_19, %c128], %21 {strides = array<i32>} : memref<8x160xbf16, #tpu.memory_space<vmem>>, vector<8x32xbf16>,
    %c0_20 = arith.constant 0 : index
    %c0_21 = arith.constant 0 : index
    %23 = vector.load %arg8[%c0_20, %c0_21] : memref<8x160xbf16, #tpu.memory_space<vmem>>, vector<8x160xbf16>
    %c0_22 = arith.constant 0 : index
    %c0_23 = arith.constant 0 : index
    %24 = vector.load %arg4[%c0_22, %c0_23] : memref<160x64xbf16, #tpu.memory_space<vmem>>, vector<160x64xbf16>
    %cst = arith.constant dense<0.000000e+00> : vector<8x64xf32>
    %25 = tpu.matmul %23, %24, %cst {dimension_numbers = #tpu.dot_dimension_numbers<[1], [0], [0], [1], [0, 0, 1, 1], [], []>} : vector<8x160xbf16>, vector<160x64xbf16>, vector<8x64xf32> -> vector<8x64xf32>
    %c0_24 = arith.constant 0 : index
    %c0_25 = arith.constant 0 : index
    %26 = vector.load %arg5[%c0_24, %c0_25] : memref<1x64xf32, #tpu.memory_space<vmem>>, vector<1x64xf32>
    %27 = vector.broadcast %26 : vector<1x64xf32> to vector<8x64xf32>
    %28 = arith.addf %25, %27 : vector<8x64xf32>
    %29 = vector.extract_strided_slice %28 {offsets = [0, 0], sizes = [8, 32], strides = [1, 1]} : vector<8x64xf32> to vector<8x32xf32>
    %30 = vector.extract_strided_slice %28 {offsets = [0, 32], sizes = [8, 32], strides = [1, 1]} : vector<8x64xf32> to vector<8x32xf32>
    %cst_26 = arith.constant 0.000000e+00 : f32
    %31 = vector.broadcast %cst_26 : f32 to vector<8x32xf32>
    %32 = arith.subf %31, %30 : vector<8x32xf32>
    %33 = math.exp %32 : vector<8x32xf32>
    %cst_27 = arith.constant 1.000000e+00 : f32
    %34 = vector.broadcast %cst_27 : f32 to vector<8x32xf32>
    %35 = arith.addf %34, %33 : vector<8x32xf32>
    %36 = tpu.reciprocal %35 {approx = true} : vector<8x32xf32> -> vector<8x32xf32>
    %37 = arith.mulf %29, %36 : vector<8x32xf32>
    %c0_28 = arith.constant 0 : index
    %c0_29 = arith.constant 0 : index
    %c0_30 = arith.constant 0 : index
    %38 = vector.load %arg6[%c0_28, %c0_29, %c0_30] : memref<1x8x32xf32, #tpu.memory_space<vmem>>, vector<1x8x32xf32>
    %39 = vector.shape_cast %38 : vector<1x8x32xf32> to vector<8x32xf32>
    %40 = vector.shape_cast %37 : vector<8x32xf32> to vector<1x8x32xf32>
    tpu.vector_store %arg6[%c0_28, %c0_29, %c0_30], %40 {strides = array<i32>} : memref<1x8x32xf32, #tpu.memory_space<vmem>>, vector<1x8x32xf32>,
    return
  }
  func.func @transform_0(%arg0: i32, %arg1: i32) -> (i32, i32, i32) {
    %c0_i32 = arith.constant 0 : i32
    %c0_i32_0 = arith.constant 0 : i32
    return %arg0, %arg1, %c0_i32 : i32, i32, i32
  }
  func.func @transform_1(%arg0: i32, %arg1: i32) -> (i32, i32, i32) {
    %c1_i32 = arith.constant 1 : i32
    %0 = arith.addi %arg1, %c1_i32 : i32
    %c1_i32_0 = arith.constant 1 : i32
    %1 = arith.muli %0, %c1_i32_0 : i32
    %c0_i32 = arith.constant 0 : i32
    %c0_i32_1 = arith.constant 0 : i32
    return %arg0, %1, %c0_i32 : i32, i32, i32
  }
  func.func @transform_2(%arg0: i32, %arg1: i32) -> (i32, i32) {
    %c0_i32 = arith.constant 0 : i32
    %c0_i32_0 = arith.constant 0 : i32
    %c0_i32_1 = arith.constant 0 : i32
    return %c0_i32, %c0_i32_0 : i32, i32
  }
  func.func @transform_3(%arg0: i32, %arg1: i32) -> (i32, i32) {
    %c0_i32 = arith.constant 0 : i32
    %c0_i32_0 = arith.constant 0 : i32
    %c0_i32_1 = arith.constant 0 : i32
    return %c0_i32, %c0_i32_0 : i32, i32
  }
  func.func @transform_4(%arg0: i32, %arg1: i32) -> (i32, i32, i32) {
    %c0_i32 = arith.constant 0 : i32
    %c0_i32_0 = arith.constant 0 : i32
    return %arg0, %arg1, %c0_i32 : i32, i32, i32
  }
}

</mosaic_0001>

<llo_original>
// kernel: tpu_custom_call.1
$region0: #{tpu_custom_call.1}
  #allocation0 [shape = 'u32[]', space=smem, size = 0x4, offset = 0x4, fixed_abs, tag = 'smem constant byte address 0x4 - core index']
  #allocation1 [shape = 'u32[144,128]{1,0:T(1,128)}', space=vmem, size = 0x12000, scoped, tag = 'internal scratch']
  #allocation2 [shape = 'f32[16,32]{1,0:T(8,128)}', space=vmem, size = 0x2000, scoped, tag = 'scratch operand']
  #allocation3 [shape = 'bf16[8,160]{1,0:T(8,128)(2,1)}', space=vmem, size = 0x1000, scoped, tag = 'scratch operand']
  %s0 = inlined_call_operand.vmem [shape: bf16[2,16,32], index: 0, kind: input, shape index: {}]
  %s1 = inlined_call_operand.vmem [shape: bf16[2,16,32], index: 1, kind: input, shape index: {}]
  %s2 = inlined_call_operand.vmem [shape: bf16[160,64], index: 2, kind: input, shape index: {}]
  %s3 = inlined_call_operand.vmem [shape: f32[1,64], index: 3, kind: input, shape index: {}]
  %s4 = inlined_call_operand.hbm [shape: f32[2,8,32], index: 4, kind: output, shape index: {}]
  %s5 = sld [smem:[#allocation0]]
  $region49: #{tpu_custom_call.1} parent=0
    _
  %s7 = ssub.s32 1, %s5
  %s8 = scalar_select 0, %s7, %s5
  $region1: #{tpu_custom_call.1} parent=0
    #allocation4 [shape = 'u8[8192]{0}', space=vmem, size = 0x2000, scoped, tag = 'output window, operand 0']
    #allocation5 [shape = 's32[2]{0}', space=sflag, size = 0x8, scoped, tag = 'scoped memory for tpu_custom_call.1']
    %9 = vsyncpa [#allocation5], 0
    %s10 = scalar_lea.sflag [#allocation5], 1
    %11 = vsyncpa %s10, 0
    loop: start=0, step=1, limit=4
    $region2: #{tpu_custom_call.1} parent=1 // loop_pre_header
      _
    $region3: #{tpu_custom_call.1} parent=1 // loop_header
      %s13 = sphi 0, %s17
      %p14 = scmp.ge.s32.totalorder %s13, 4
      %s20 = sphi 0, %s32
      %s21 = sphi 0, %s28
      %s22 = sphi 0, %s20
      %s23 = sphi 0, %s21
      %s24 = sphi 0, %s22
      %s25 = sphi 0, %s23
      %s37 = sphi 0, %s39
      %s40 = sphi 0, %s37
      %s41 = sphi 0, %s40
      %s57 = sphi 0, %s41
      %s67 = sphi 0, %s69
      %s70 = sphi 0, %s67
      %s71 = sphi 0, %s70
      %s87 = sphi 0, %s71
      %s91 = sphi 0, %s91
      %s93 = sphi 0, %s91
      %s94 = sphi 0, %s93
      %s108 = sphi 0, %s94
      %s112 = sphi 0, %s112
      %s114 = sphi 0, %s112
      %s115 = sphi 0, %s114
      %s129 = sphi 0, %s115
      %s137 = sphi 0, %s139
      %s140 = sphi 0, %s137
      %s141 = sphi 0, %s140
      %s157 = sphi 0, %s141
    $region4: #{tpu_custom_call.1} parent=1 // loop_header_branch
      %16 = sbr.rel (%p14) target = $region8
    $region5: #{tpu_custom_call.1} parent=1 // loop_body
      %s18 = ssub.s32 %s13, 1
      %s19 = ssub.s32 %s13, 2
      %s26 = sadd.s32 1, %s21
      %p27 = scmp.ge.s32.totalorder %s26, 1
      %s28 = scalar_select %p27, 0, %s26
      %s29 = sadd.s32 1, %s20
      %s30 = scalar_select %p27, %s29, %s20
      %p31 = scmp.ge.s32.totalorder %s30, 2
      %s32 = scalar_select %p31, 0, %s30
      %s33 = ssub.s32 %s20, %s32
      %s34 = ssub.s32 %s21, %s28
      %s35 = sor.u32 %s33, %s34
      %p36 = scmp.eq.s32.totalorder %s35, 0
      %s38 = sadd.s32 %s37, 1
      %s39 = scalar_select %p36, %s37, %s38
      %p42 = pneg %p36
      %p43 = scmp.eq.s32.totalorder %s13, 1
      %p44 = por %p42, %p43
      %p45 = scmp.ne.s32.totalorder %s37, %s40
      %p46 = scmp.eq.s32.totalorder %s13, 0
      %p47 = por %p45, %p46
      %p48 = scmp.ne.s32.totalorder %s37, %s40
      %p49 = scmp.eq.s32.totalorder %s18, 1
      %p50 = por %p48, %p49
      %p51 = scmp.ne.s32.totalorder %s40, %s41
      %p52 = scmp.eq.s32.totalorder %s18, 0
      %p53 = por %p51, %p52
      %p54 = scmp.ne.s32.totalorder %s40, %s41
      %p55 = scmp.eq.s32.totalorder %s19, 1
      %p56 = por %p54, %p55
      %p58 = scmp.ne.s32.totalorder %s41, %s57
      %p59 = scmp.eq.s32.totalorder %s19, 0
      %p60 = por %p58, %p59
      %s61 = sadd.s32 %s21, 1
      %s62 = sadd.s32 %s28, 1
      %s63 = ssub.s32 %s20, %s32
      %s64 = ssub.s32 %s61, %s62
      %s65 = sor.u32 %s63, %s64
      %p66 = scmp.eq.s32.totalorder %s65, 0
      %s68 = sadd.s32 %s67, 1
      %s69 = scalar_select %p66, %s67, %s68
      %p72 = pneg %p66
      %p73 = scmp.eq.s32.totalorder %s13, 1
      %p74 = por %p72, %p73
      %p75 = scmp.ne.s32.totalorder %s67, %s70
      %p76 = scmp.eq.s32.totalorder %s13, 0
      %p77 = por %p75, %p76
      %p78 = scmp.ne.s32.totalorder %s67, %s70
      %p79 = scmp.eq.s32.totalorder %s18, 1
      %p80 = por %p78, %p79
      %p81 = scmp.ne.s32.totalorder %s70, %s71
      %p82 = scmp.eq.s32.totalorder %s18, 0
      %p83 = por %p81, %p82
      %p84 = scmp.ne.s32.totalorder %s70, %s71
      %p85 = scmp.eq.s32.totalorder %s19, 1
      %p86 = por %p84, %p85
      %p88 = scmp.ne.s32.totalorder %s71, %s87
      %p89 = scmp.eq.s32.totalorder %s19, 0
      %p90 = por %p88, %p89
      %s92 = sadd.s32 %s91, 1
      %p95 = scmp.eq.s32.totalorder %s13, 1
      %p96 = scmp.ne.s32.totalorder %s91, %s93
      %p97 = scmp.eq.s32.totalorder %s13, 0
      %p98 = por %p96, %p97
      %p99 = scmp.ne.s32.totalorder %s91, %s93
      %p100 = scmp.eq.s32.totalorder %s18, 1
      %p101 = por %p99, %p100
      %p102 = scmp.ne.s32.totalorder %s93, %s94
      %p103 = scmp.eq.s32.totalorder %s18, 0
      %p104 = por %p102, %p103
      %p105 = scmp.ne.s32.totalorder %s93, %s94
      %p106 = scmp.eq.s32.totalorder %s19, 1
      %p107 = por %p105, %p106
      %p109 = scmp.ne.s32.totalorder %s94, %s108
      %p110 = scmp.eq.s32.totalorder %s19, 0
      %p111 = por %p109, %p110
      %s113 = sadd.s32 %s112, 1
      %p116 = scmp.eq.s32.totalorder %s13, 1
      %p117 = scmp.ne.s32.totalorder %s112, %s114
      %p118 = scmp.eq.s32.totalorder %s13, 0
      %p119 = por %p117, %p118
      %p120 = scmp.ne.s32.totalorder %s112, %s114
      %p121 = scmp.eq.s32.totalorder %s18, 1
      %p122 = por %p120, %p121
      %p123 = scmp.ne.s32.totalorder %s114, %s115
      %p124 = scmp.eq.s32.totalorder %s18, 0
      %p125 = por %p123, %p124
      %p126 = scmp.ne.s32.totalorder %s114, %s115
      %p127 = scmp.eq.s32.totalorder %s19, 1
      %p128 = por %p126, %p127
      %p130 = scmp.ne.s32.totalorder %s115, %s129
      %p131 = scmp.eq.s32.totalorder %s19, 0
      %p132 = por %p130, %p131
      %s133 = ssub.s32 %s20, %s32
      %s134 = ssub.s32 %s21, %s28
      %s135 = sor.u32 %s133, %s134
      %p136 = scmp.eq.s32.totalorder %s135, 0
      %s138 = sadd.s32 %s137, 1
      %s139 = scalar_select %p136, %s137, %s138
      %p142 = pneg %p136
      %p143 = scmp.eq.s32.totalorder %s13, 1
      %p144 = por %p142, %p143
      %p145 = scmp.ne.s32.totalorder %s137, %s140
      %p146 = scmp.eq.s32.totalorder %s13, 0
      %p147 = por %p145, %p146
      %p148 = scmp.ne.s32.totalorder %s137, %s140
      %p149 = scmp.eq.s32.totalorder %s18, 1
      %p150 = por %p148, %p149
      %p151 = scmp.ne.s32.totalorder %s140, %s141
      %p152 = scmp.eq.s32.totalorder %s18, 0
      %p153 = por %p151, %p152
      %p154 = scmp.ne.s32.totalorder %s140, %s141
      %p155 = scmp.eq.s32.totalorder %s19, 1
      %p156 = por %p154, %p155
      %p158 = scmp.ne.s32.totalorder %s141, %s157
      %p159 = scmp.eq.s32.totalorder %s19, 0
      %p160 = por %p158, %p159
      %p161 = scmp.le.s32.totalorder 1, %s13
      %p162 = scmp.lt.s32.totalorder %s13, 3
      %p163 = pnand %p161, %p162
      %p164 = pneg %p163
      // Predicated region
      $region9: #{tpu_custom_call.1} parent=5 // pred_check
        _
      $region10: #{tpu_custom_call.1} parent=5 // pred_check_branch
        %166 = sbr.rel (%p163) target = $region12
      $region11: #{tpu_custom_call.1} parent=5 // pred_region
        %s167 = ssub.s32 %s13, 1
        // Predicated region
        $region13: #{tpu_custom_call.1} parent=11 // pred_check
          %p168 = pneg %p104
        $region14: #{tpu_custom_call.1} parent=11 // pred_check_branch
          %170 = sbr.rel (%p168) target = $region16
        $region15: #{tpu_custom_call.1} parent=11 // pred_region
          _
        $region16: #{tpu_custom_call.1} parent=11 // pred_fallthru
          _
        // Predicated region
        $region17: #{tpu_custom_call.1} parent=11 // pred_check
          %p171 = pneg %p125
        $region18: #{tpu_custom_call.1} parent=11 // pred_check_branch
          %173 = sbr.rel (%p171) target = $region20
        $region19: #{tpu_custom_call.1} parent=11 // pred_region
          _
        $region20: #{tpu_custom_call.1} parent=11 // pred_fallthru
          _
      $region12: #{tpu_custom_call.1} parent=5 // pred_fallthru
        _
      %p174 = scmp.lt.s32.totalorder %s13, 2
      // Predicated region
      $region21: #{tpu_custom_call.1} parent=5 // pred_check
        %p175 = pneg %p174
      $region22: #{tpu_custom_call.1} parent=5 // pred_check_branch
        %177 = sbr.rel (%p175) target = $region24
      $region23: #{tpu_custom_call.1} parent=5 // pred_region
        // Predicated region
        $region25: #{tpu_custom_call.1} parent=23 // pred_check
          %p178 = pneg %p47
        $region26: #{tpu_custom_call.1} parent=23 // pred_check_branch
          %180 = sbr.rel (%p178) target = $region28
        $region27: #{tpu_custom_call.1} parent=23 // pred_region
          %p181 = scmp.lt.s32.totalorder %s20, 1
          %s182 = scalar_select %p181, %s20, 1
          %p183 = scmp.lt.s32.totalorder %s21, 1
          %s184 = scalar_select %p183, %s21, 1
          %s185 = smul.addr %s182, 2
          %s186 = sadd.s32 %s184, %s185
          %s187 = smul.addr %s186, 4
          %s188 = scalar_lea.vmem %s0, %s187
        $region28: #{tpu_custom_call.1} parent=23 // pred_fallthru
          _
        // Predicated region
        $region29: #{tpu_custom_call.1} parent=23 // pred_check
          %p189 = pneg %p77
        $region30: #{tpu_custom_call.1} parent=23 // pred_check_branch
          %191 = sbr.rel (%p189) target = $region32
        $region31: #{tpu_custom_call.1} parent=23 // pred_region
          %s192 = sadd.s32 %s21, 1
          %p193 = scmp.lt.s32.totalorder %s20, 1
          %s194 = scalar_select %p193, %s20, 1
          %p195 = scmp.lt.s32.totalorder %s192, 1
          %s196 = scalar_select %p195, %s192, 1
          %s197 = smul.addr %s194, 2
          %s198 = sadd.s32 %s196, %s197
          %s199 = smul.addr %s198, 4
          %s200 = scalar_lea.vmem %s1, %s199
          %s201 = sadd.s32 %s21, 1
        $region32: #{tpu_custom_call.1} parent=23 // pred_fallthru
          _
      $region24: #{tpu_custom_call.1} parent=5 // pred_fallthru
        _
      %p202 = scmp.le.s32.totalorder 1, %s13
      %p203 = scmp.lt.s32.totalorder %s13, 3
      %p204 = pnand %p202, %p203
      %p205 = pneg %p204
      // Predicated region
      $region33: #{tpu_custom_call.1} parent=5 // pred_check
        _
      $region34: #{tpu_custom_call.1} parent=5 // pred_check_branch
        %207 = sbr.rel (%p204) target = $region36
      $region35: #{tpu_custom_call.1} parent=5 // pred_region
        %s208 = ssub.s32 %s13, 1
        %p209 = scmp.lt.s32.totalorder %s22, 1
        %s210 = scalar_select %p209, %s22, 1
        %p211 = scmp.lt.s32.totalorder %s23, 1
        %s212 = scalar_select %p211, %s23, 1
        %s213 = smul.addr %s210, 2
        %s214 = sadd.s32 %s212, %s213
        %s215 = smul.addr %s214, 4
        %s216 = scalar_lea.vmem %s0, %s215
        %p217 = pneg %p53
        %p218 = pneg %p50
        %s219 = sadd.s32 %s23, 1
        %p220 = scmp.lt.s32.totalorder %s22, 1
        %s221 = scalar_select %p220, %s22, 1
        %p222 = scmp.lt.s32.totalorder %s219, 1
        %s223 = scalar_select %p222, %s219, 1
        %s224 = smul.addr %s221, 2
        %s225 = sadd.s32 %s223, %s224
        %s226 = smul.addr %s225, 4
        %s227 = scalar_lea.vmem %s1, %s226
        %p228 = pneg %p83
        %p229 = pneg %p80
        %p230 = pneg %p104
        %p231 = pneg %p101
        %p232 = pneg %p125
        %p233 = pneg %p122
        %p234 = pneg %p153
        %p235 = pneg %p150
        %s236 = sand.u32 %s140, 1
        %s237 = scalar_lea.sflag [#allocation5], %s236
        %s238 = sand.u32 %s140, 1
        %s239 = smul.addr %s238, 8
        %s240 = scalar_lea.vmem [#allocation4], %s239
        %p241 = scmp.lt.s32.totalorder %s22, 1
        %s242 = scalar_select %p241, %s22, 1
        %p243 = scmp.lt.s32.totalorder %s23, 1
        %s244 = scalar_select %p243, %s23, 1
        %s245 = smul.addr %s242, 2
        %s246 = sadd.s32 %s244, %s245
        %s247 = smul.addr %s246, 4
        %s248 = scalar_lea.vmem %s0, %s247
        %s249 = sadd.s32 %s23, 1
        %p250 = scmp.lt.s32.totalorder %s22, 1
        %s251 = scalar_select %p250, %s22, 1
        %p252 = scmp.lt.s32.totalorder %s249, 1
        %s253 = scalar_select %p252, %s249, 1
        %s254 = smul.addr %s251, 2
        %s255 = sadd.s32 %s253, %s254
        %s256 = smul.addr %s255, 4
        %s257 = scalar_lea.vmem %s1, %s256
        %s258 = sadd.s32 %s23, 1
        %v260 = vld [vmem:[%s248] sm:$0xf]
        %v261 = vunpack.c.l.bf16 %v260
        %vm262 = vcmask 261120
        %263 = vst.msk [vmem:[#allocation2] sm:$0xff] %vm262, %v261
        %v264 = vld [vmem:[%s257] sm:$0xf]
        %v265 = vunpack.c.l.bf16 %v264
        %266 = vst.msk [vmem:[#allocation2 + $0x8] sm:$0xff] %vm262, %v265
        %v267 = vld [vmem:[#allocation2] sm:$0xff]
        %v268 = vpack.c.bf16 %v267, %v267
        %vm269 = vcmask 257024
        %270 = vst.msk [vmem:[#allocation3] sm:$0xf] %vm269, %v268
        %v271 = vld [vmem:[#allocation2 + $0x1] sm:$0xff]
        %v272 = vpack.c.bf16 %v271, %v271
        %v274 = vunpack.c.l.b16 %v272
        %v275 = vpack.c.b16 %v274, %v274
        %276 = vrot.lane.b32.xlu0 %v275, 32
        %v277 = vpop.permute.xlu0 %276
        %vm279 = vcmask 519424
        %280 = vst.msk [vmem:[#allocation3] sm:$0xf] %vm279, %v277
        %v281 = vld [vmem:[#allocation2 + $0x2] sm:$0xff]
        %v282 = vpack.c.bf16 %v281, %v281
        %v284 = vunpack.c.l.b16 %v282
        %v285 = vpack.c.b16 %v284, %v284
        %286 = vrot.lane.b32.xlu0 %v285, 64
        %v287 = vpop.permute.xlu0 %286
        %vm289 = vcmask 781824
        %290 = vst.msk [vmem:[#allocation3] sm:$0xf] %vm289, %v287
        %v291 = vld [vmem:[#allocation2 + $0x3] sm:$0xff]
        %v292 = vpack.c.bf16 %v291, %v291
        %v294 = vunpack.c.l.b16 %v292
        %v295 = vpack.c.b16 %v294, %v294
        %296 = vrot.lane.b32.xlu0 %v295, 96
        %v297 = vpop.permute.xlu0 %296
        %vm299 = vcmask 1044224
        %300 = vst.msk [vmem:[#allocation3] sm:$0xf] %vm299, %v297
        %v301 = vld [vmem:[#allocation2 + $0x4] sm:$0xff]
        %v302 = vpack.c.bf16 %v301, %v301
        %303 = vst.msk [vmem:[#allocation3 + $0x4] sm:$0xf] %vm269, %v302
        %v304 = vld [vmem:[#allocation3] sm:$0xff]
        %v305 = vld [vmem:[%s2] sm:$0xf]
        %v306 = vld [vmem:[%s2 + $0x4] sm:$0xf]
        %v307 = vld [vmem:[%s2 + $0x8] sm:$0xf]
        %v308 = vld [vmem:[%s2 + $0xc] sm:$0xf]
        %v309 = vld [vmem:[%s2 + $0x10] sm:$0xf]
        %v310 = vld [vmem:[%s2 + $0x14] sm:$0xf]
        %v311 = vld [vmem:[%s2 + $0x18] sm:$0xf]
        %v312 = vld [vmem:[%s2 + $0x1c] sm:$0xf]
        %v313 = vld [vmem:[%s2 + $0x20] sm:$0xf]
        %v314 = vld [vmem:[%s2 + $0x24] sm:$0xf]
        %v315 = vld [vmem:[%s2 + $0x28] sm:$0xf]
        %v316 = vld [vmem:[%s2 + $0x2c] sm:$0xf]
        %v317 = vld [vmem:[%s2 + $0x30] sm:$0xf]
        %v318 = vld [vmem:[%s2 + $0x34] sm:$0xf]
        %v319 = vld [vmem:[%s2 + $0x38] sm:$0xf]
        %v320 = vld [vmem:[%s2 + $0x3c] sm:$0xf]
        %v321 = vld [vmem:[%s2 + $0x40] sm:$0xf]
        %v322 = vld [vmem:[%s2 + $0x44] sm:$0xf]
        %v323 = vld [vmem:[%s2 + $0x48] sm:$0xf]
        %v324 = vld [vmem:[%s2 + $0x4c] sm:$0xf]
        %v325 = vld [vmem:[%s3] sm:$0x1]
        %v327 = vlaneseq
        %v328 = vshrl.u32 %v327, 7
        %v329 = vsub.s32 0, %v328
        %v330 = vrot.slane %v325, %v329
        %v333 = vunpack.c.l.b16 %v304
        %v334 = vunpack.c.h.b16 %v304
        %v335 = vpack.c.b16 %v333, %v333
        %v336 = vpack.c.b16 %v334, %v334
        %v358 = vunpack.c.l.b16 %v305
        %v359 = vunpack.c.l.b16 %v306
        %v360 = vunpack.c.l.b16 %v307
        %v361 = vunpack.c.l.b16 %v308
        %v362 = vunpack.c.l.b16 %v309
        %v363 = vunpack.c.l.b16 %v310
        %v364 = vunpack.c.l.b16 %v311
        %v365 = vunpack.c.l.b16 %v312
        %v366 = vunpack.c.l.b16 %v313
        %v367 = vunpack.c.l.b16 %v314
        %v368 = vunpack.c.l.b16 %v315
        %v369 = vunpack.c.l.b16 %v316
        %v370 = vunpack.c.l.b16 %v317
        %v371 = vunpack.c.l.b16 %v318
        %v372 = vunpack.c.l.b16 %v319
        %v373 = vunpack.c.l.b16 %v320
        %v374 = vunpack.c.l.b16 %v321
        %v375 = vunpack.c.l.b16 %v322
        %v376 = vunpack.c.l.b16 %v323
        %v377 = vunpack.c.l.b16 %v324
        %v378 = vpack.c.b16 %v359, %v358
        %v379 = vpack.c.b16 %v361, %v360
        %v380 = vpack.c.b16 %v363, %v362
        %v381 = vpack.c.b16 %v365, %v364
        %v382 = vpack.c.b16 %v367, %v366
        %v383 = vpack.c.b16 %v369, %v368
        %v384 = vpack.c.b16 %v371, %v370
        %v385 = vpack.c.b16 %v373, %v372
        %v386 = vpack.c.b16 %v375, %v374
        %v387 = vpack.c.b16 %v377, %v376
        %v399 = vsel %vm262, %v336, 0
        %401 = vmatprep.subr.bf16.mxu0 0
        %402 = vmatpush1.bf16.msra.mxu0 %v385
        %403 = vmatprep.subr.bf16.mxu0 0
        %404 = vmatpush1.bf16.msra.mxu0 %v384
        %405 = vmatprep.subr.bf16.mxu0 0
        %406 = vmatpush1.bf16.msra.mxu0 %v383
        %407 = vmatprep.subr.bf16.mxu0 0
        %408 = vmatpush1.bf16.msra.mxu0 %v382
        %409 = vmatprep.subr.bf16.mxu0 0
        %410 = vmatpush1.bf16.msra.mxu0 %v381
        %411 = vmatprep.subr.bf16.mxu0 0
        %412 = vmatpush1.bf16.msra.mxu0 %v380
        %413 = vmatprep.subr.bf16.mxu0 0
        %414 = vmatpush1.bf16.msra.mxu0 %v379
        %415 = vmatprep.subr.bf16.mxu0 0
        %416 = vmatpush1.bf16.msra.mxu0 %v378
        %417 = vmatprep.subr.bf16.mxu0 0
        %418 = vmatpush2.bf16.msra.mxu0 0
        %419 = vmatprep.subr.bf16.mxu0 0
        %420 = vmatpush2.bf16.msra.mxu0 0
        %421 = vmatprep.subr.bf16.mxu0 0
        %422 = vmatpush2.bf16.msra.mxu0 0
        %423 = vmatprep.subr.bf16.mxu0 0
        %424 = vmatpush2.bf16.msra.mxu0 0
        %425 = vmatprep.subr.bf16.mxu0 0
        %426 = vmatpush2.bf16.msra.mxu0 0
        %427 = vmatprep.subr.bf16.mxu0 0
        %428 = vmatpush2.bf16.msra.mxu0 0
        %429 = vmatprep.subr.bf16.mxu0 0
        %430 = vmatpush2.bf16.msra.mxu0 %v387
        %431 = vmatprep.subr.bf16.mxu0 0
        %432 = vmatpush2.bf16.msra.mxu0 %v386
        %433 = vmatprep.mubr.bf16.mxu0 %v399
        %434 = vmatmul.mubr.bf16.gmra.mxu0 %v335
        %v435 = vpop.f32.mrf.mxu0
        %v436 = vadd.f32 %v330, %v435
        %v437 = vpop.f32.mrf.mxu0
        %v438 = vpop.f32.mrf.mxu0
        %v439 = vpop.f32.mrf.mxu0
        %440 = vdwg.mxu0
        %v441 = vsub.f32 0.0, %v436
        %v442 = vmul.f32 %v441, 1.442695
        %v443 = vpow.pop %v442
        %v444 = vadd.f32 %v443, 1.0
        %v445 = vrcp.pop %v444
        %447 = vrot.lane.b32.xlu0 %v445, 96
        %v448 = vpop.permute.xlu0 %447
        %v450 = vmul.f32 %v436, %v448
        %451 = vst.msk [vmem:[%s240] sm:$0xff] %vm262, %v450
        %s452 = sand.u32 %s140, 1
        %s453 = scalar_lea.sflag [#allocation5], %s452
        %s454 = sand.u32 %s140, 1
        %s455 = smul.addr %s454, 8
        %s456 = scalar_lea.vmem [#allocation4], %s455
        // Predicated region
        $region37: #{tpu_custom_call.1} parent=35 // pred_check
          %p457 = pneg %p150
        $region38: #{tpu_custom_call.1} parent=35 // pred_check_branch
          %459 = sbr.rel (%p457) target = $region40
        $region39: #{tpu_custom_call.1} parent=35 // pred_region
          %s461 = ssub.s32 128, 128
          %462 = vsyncadd %s453, %s461
          %s463 = sadd.s32 %s23, %s22
          %s464 = smul.addr %s463, 128
          %s465 = scalar_lea.hbm %s4, %s464
          %s467 = sshll.u32 %s456, 4
          %s468 = int_to_ptr.vmem [resolvable:$true] %s467
          %470 = dma.vmem_to_hbm [thread:$0]  %s468, 128, %s465, %s453
        $region40: #{tpu_custom_call.1} parent=35 // pred_fallthru
          _
      $region36: #{tpu_custom_call.1} parent=5 // pred_fallthru
        _
      %p471 = scmp.le.s32.totalorder 2, %s13
      // Predicated region
      $region41: #{tpu_custom_call.1} parent=5 // pred_check
        %p472 = pneg %p471
      $region42: #{tpu_custom_call.1} parent=5 // pred_check_branch
        %474 = sbr.rel (%p472) target = $region44
      $region43: #{tpu_custom_call.1} parent=5 // pred_region
        %s475 = ssub.s32 %s13, 2
        // Predicated region
        $region45: #{tpu_custom_call.1} parent=43 // pred_check
          %p476 = pneg %p156
        $region46: #{tpu_custom_call.1} parent=43 // pred_check_branch
          %478 = sbr.rel (%p476) target = $region48
        $region47: #{tpu_custom_call.1} parent=43 // pred_region
          %s479 = sand.u32 %s141, 1
          %s480 = scalar_lea.sflag [#allocation5], %s479
          %s481 = sand.u32 %s141, 1
          %s482 = smul.addr %s481, 8
          %s483 = scalar_lea.vmem [#allocation4], %s482
          %484 = dma.done %s480, 128
        $region48: #{tpu_custom_call.1} parent=43 // pred_fallthru
          _
      $region44: #{tpu_custom_call.1} parent=5 // pred_fallthru
        _
    $region6: #{tpu_custom_call.1} parent=1 // loop_footer
      %s17 = sadd.s32 1, %s13
    $region7: #{tpu_custom_call.1} parent=1 // loop_footer_branch
      %12 = sbr.rel target = $region3
    $region8: #{tpu_custom_call.1} parent=1 // loop_exit
      _
    %485 = vsyncpa [#allocation5], 1
    %s486 = scalar_lea.sflag [#allocation5], 1
    %487 = vsyncpa %s486, 1

// kernel: tpu_custom_call.1
$region0: #{tpu_custom_call.1}
  #allocation0 [shape = 'u32[]', space=smem, size = 0x4, offset = 0x4, fixed_abs, tag = 'smem constant byte address 0x4 - core index']
  #allocation1 [shape = 'u32[144,128]{1,0:T(1,128)}', space=vmem, size = 0x12000, scoped, tag = 'internal scratch']
  #allocation2 [shape = 'f32[16,32]{1,0:T(8,128)}', space=vmem, size = 0x2000, scoped, tag = 'scratch operand']
  #allocation3 [shape = 'bf16[8,160]{1,0:T(8,128)(2,1)}', space=vmem, size = 0x1000, scoped, tag = 'scratch operand']
  %s0 = inlined_call_operand.vmem [shape: bf16[2,16,32], index: 0, kind: input, shape index: {}]
  %s1 = inlined_call_operand.vmem [shape: bf16[2,16,32], index: 1, kind: input, shape index: {}]
  %s2 = inlined_call_operand.vmem [shape: bf16[160,64], index: 2, kind: input, shape index: {}]
  %s3 = inlined_call_operand.vmem [shape: f32[1,64], index: 3, kind: input, shape index: {}]
  %s4 = inlined_call_operand.hbm [shape: f32[2,8,32], index: 4, kind: output, shape index: {}]
  %s5 = sld [smem:[#allocation0]]
  $region49: #{tpu_custom_call.1} parent=0
    _
  %s7 = ssub.s32 1, %s5
  %s8 = scalar_select 0, %s7, %s5
  $region1: #{tpu_custom_call.1} parent=0
    #allocation4 [shape = 'u8[8192]{0}', space=vmem, size = 0x2000, scoped, tag = 'output window, operand 0']
    #allocation5 [shape = 's32[2]{0}', space=sflag, size = 0x8, scoped, tag = 'scoped memory for tpu_custom_call.1']
    %9 = vsyncpa [#allocation5], 0
    %s10 = scalar_lea.sflag [#allocation5], 1
    %11 = vsyncpa %s10, 0
    loop: start=0, step=1, limit=4
    $region2: #{tpu_custom_call.1} parent=1 // loop_pre_header
      _
    $region3: #{tpu_custom_call.1} parent=1 // loop_header
      %s13 = sphi 0, %s17
      %p14 = scmp.ge.s32.totalorder %s13, 4
      %s20 = sphi 0, %s32
      %s21 = sphi 0, %s28
      %s22 = sphi 0, %s20
      %s23 = sphi 0, %s21
      %s24 = sphi 0, %s22
      %s25 = sphi 0, %s23
      %s37 = sphi 0, %s39
      %s40 = sphi 0, %s37
      %s41 = sphi 0, %s40
      %s57 = sphi 0, %s41
      %s67 = sphi 0, %s69
      %s70 = sphi 0, %s67
      %s71 = sphi 0, %s70
      %s87 = sphi 0, %s71
      %s91 = sphi 0, %s91
      %s93 = sphi 0, %s91
      %s94 = sphi 0, %s93
      %s108 = sphi 0, %s94
      %s112 = sphi 0, %s112
      %s114 = sphi 0, %s112
      %s115 = sphi 0, %s114
      %s129 = sphi 0, %s115
      %s137 = sphi 0, %s139
      %s140 = sphi 0, %s137
      %s141 = sphi 0, %s140
      %s157 = sphi 0, %s141
    $region4: #{tpu_custom_call.1} parent=1 // loop_header_branch
      %16 = sbr.rel (%p14) target = $region8
    $region5: #{tpu_custom_call.1} parent=1 // loop_body
      %s18 = ssub.s32 %s13, 1
      %s19 = ssub.s32 %s13, 2
      %s26 = sadd.s32 1, %s21
      %p27 = scmp.ge.s32.totalorder %s26, 1
      %s28 = scalar_select %p27, 0, %s26
      %s29 = sadd.s32 1, %s20
      %s30 = scalar_select %p27, %s29, %s20
      %p31 = scmp.ge.s32.totalorder %s30, 2
      %s32 = scalar_select %p31, 0, %s30
      %s33 = ssub.s32 %s20, %s32
      %s34 = ssub.s32 %s21, %s28
      %s35 = sor.u32 %s33, %s34
      %p36 = scmp.eq.s32.totalorder %s35, 0
      %s38 = sadd.s32 %s37, 1
      %s39 = scalar_select %p36, %s37, %s38
      %p42 = pneg %p36
      %p43 = scmp.eq.s32.totalorder %s13, 1
      %p44 = por %p42, %p43
      %p45 = scmp.ne.s32.totalorder %s37, %s40
      %p46 = scmp.eq.s32.totalorder %s13, 0
      %p47 = por %p45, %p46
      %p48 = scmp.ne.s32.totalorder %s37, %s40
      %p49 = scmp.eq.s32.totalorder %s18, 1
      %p50 = por %p48, %p49
      %p51 = scmp.ne.s32.totalorder %s40, %s41
      %p52 = scmp.eq.s32.totalorder %s18, 0
      %p53 = por %p51, %p52
      %p54 = scmp.ne.s32.totalorder %s40, %s41
      %p55 = scmp.eq.s32.totalorder %s19, 1
      %p56 = por %p54, %p55
      %p58 = scmp.ne.s32.totalorder %s41, %s57
      %p59 = scmp.eq.s32.totalorder %s19, 0
      %p60 = por %p58, %p59
      %s61 = sadd.s32 %s21, 1
      %s62 = sadd.s32 %s28, 1
      %s63 = ssub.s32 %s20, %s32
      %s64 = ssub.s32 %s61, %s62
      %s65 = sor.u32 %s63, %s64
      %p66 = scmp.eq.s32.totalorder %s65, 0
      %s68 = sadd.s32 %s67, 1
      %s69 = scalar_select %p66, %s67, %s68
      %p72 = pneg %p66
      %p73 = scmp.eq.s32.totalorder %s13, 1
      %p74 = por %p72, %p73
      %p75 = scmp.ne.s32.totalorder %s67, %s70
      %p76 = scmp.eq.s32.totalorder %s13, 0
      %p77 = por %p75, %p76
      %p78 = scmp.ne.s32.totalorder %s67, %s70
      %p79 = scmp.eq.s32.totalorder %s18, 1
      %p80 = por %p78, %p79
      %p81 = scmp.ne.s32.totalorder %s70, %s71
      %p82 = scmp.eq.s32.totalorder %s18, 0
      %p83 = por %p81, %p82
      %p84 = scmp.ne.s32.totalorder %s70, %s71
      %p85 = scmp.eq.s32.totalorder %s19, 1
      %p86 = por %p84, %p85
      %p88 = scmp.ne.s32.totalorder %s71, %s87
      %p89 = scmp.eq.s32.totalorder %s19, 0
      %p90 = por %p88, %p89
      %s92 = sadd.s32 %s91, 1
      %p95 = scmp.eq.s32.totalorder %s13, 1
      %p96 = scmp.ne.s32.totalorder %s91, %s93
      %p97 = scmp.eq.s32.totalorder %s13, 0
      %p98 = por %p96, %p97
      %p99 = scmp.ne.s32.totalorder %s91, %s93
      %p100 = scmp.eq.s32.totalorder %s18, 1
      %p101 = por %p99, %p100
      %p102 = scmp.ne.s32.totalorder %s93, %s94
      %p103 = scmp.eq.s32.totalorder %s18, 0
      %p104 = por %p102, %p103
      %p105 = scmp.ne.s32.totalorder %s93, %s94
      %p106 = scmp.eq.s32.totalorder %s19, 1
      %p107 = por %p105, %p106
      %p109 = scmp.ne.s32.totalorder %s94, %s108
      %p110 = scmp.eq.s32.totalorder %s19, 0
      %p111 = por %p109, %p110
      %s113 = sadd.s32 %s112, 1
      %p116 = scmp.eq.s32.totalorder %s13, 1
      %p117 = scmp.ne.s32.totalorder %s112, %s114
      %p118 = scmp.eq.s32.totalorder %s13, 0
      %p119 = por %p117, %p118
      %p120 = scmp.ne.s32.totalorder %s112, %s114
      %p121 = scmp.eq.s32.totalorder %s18, 1
      %p122 = por %p120, %p121
      %p123 = scmp.ne.s32.totalorder %s114, %s115
      %p124 = scmp.eq.s32.totalorder %s18, 0
      %p125 = por %p123, %p124
      %p126 = scmp.ne.s32.totalorder %s114, %s115
      %p127 = scmp.eq.s32.totalorder %s19, 1
      %p128 = por %p126, %p127
      %p130 = scmp.ne.s32.totalorder %s115, %s129
      %p131 = scmp.eq.s32.totalorder %s19, 0
      %p132 = por %p130, %p131
      %s133 = ssub.s32 %s20, %s32
      %s134 = ssub.s32 %s21, %s28
      %s135 = sor.u32 %s133, %s134
      %p136 = scmp.eq.s32.totalorder %s135, 0
      %s138 = sadd.s32 %s137, 1
      %s139 = scalar_select %p136, %s137, %s138
      %p142 = pneg %p136
      %p143 = scmp.eq.s32.totalorder %s13, 1
      %p144 = por %p142, %p143
      %p145 = scmp.ne.s32.totalorder %s137, %s140
      %p146 = scmp.eq.s32.totalorder %s13, 0
      %p147 = por %p145, %p146
      %p148 = scmp.ne.s32.totalorder %s137, %s140
      %p149 = scmp.eq.s32.totalorder %s18, 1
      %p150 = por %p148, %p149
      %p151 = scmp.ne.s32.totalorder %s140, %s141
      %p152 = scmp.eq.s32.totalorder %s18, 0
      %p153 = por %p151, %p152
      %p154 = scmp.ne.s32.totalorder %s140, %s141
      %p155 = scmp.eq.s32.totalorder %s19, 1
      %p156 = por %p154, %p155
      %p158 = scmp.ne.s32.totalorder %s141, %s157
      %p159 = scmp.eq.s32.totalorder %s19, 0
      %p160 = por %p158, %p159
      %p161 = scmp.le.s32.totalorder 1, %s13
      %p162 = scmp.lt.s32.totalorder %s13, 3
      %p163 = pnand %p161, %p162
      %p164 = pneg %p163
      // Predicated region
      $region9: #{tpu_custom_call.1} parent=5 // pred_check
        _
      $region10: #{tpu_custom_call.1} parent=5 // pred_check_branch
        %166 = sbr.rel (%p163) target = $region12
      $region11: #{tpu_custom_call.1} parent=5 // pred_region
        %s167 = ssub.s32 %s13, 1
        // Predicated region
        $region13: #{tpu_custom_call.1} parent=11 // pred_check
          %p168 = pneg %p104
        $region14: #{tpu_custom_call.1} parent=11 // pred_check_branch
          %170 = sbr.rel (%p168) target = $region16
        $region15: #{tpu_custom_call.1} parent=11 // pred_region
          _
        $region16: #{tpu_custom_call.1} parent=11 // pred_fallthru
          _
        // Predicated region
        $region17: #{tpu_custom_call.1} parent=11 // pred_check
          %p171 = pneg %p125
        $region18: #{tpu_custom_call.1} parent=11 // pred_check_branch
          %173 = sbr.rel (%p171) target = $region20
        $region19: #{tpu_custom_call.1} parent=11 // pred_region
          _
        $region20: #{tpu_custom_call.1} parent=11 // pred_fallthru
          _
      $region12: #{tpu_custom_call.1} parent=5 // pred_fallthru
        _
      %p174 = scmp.lt.s32.totalorder %s13, 2
      // Predicated region
      $region21: #{tpu_custom_call.1} parent=5 // pred_check
        %p175 = pneg %p174
      $region22: #{tpu_custom_call.1} parent=5 // pred_check_branch
        %177 = sbr.rel (%p175) target = $region24
      $region23: #{tpu_custom_call.1} parent=5 // pred_region
        // Predicated region
        $region25: #{tpu_custom_call.1} parent=23 // pred_check
          %p178 = pneg %p47
        $region26: #{tpu_custom_call.1} parent=23 // pred_check_branch
          %180 = sbr.rel (%p178) target = $region28
        $region27: #{tpu_custom_call.1} parent=23 // pred_region
          %p181 = scmp.lt.s32.totalorder %s20, 1
          %s182 = scalar_select %p181, %s20, 1
          %p183 = scmp.lt.s32.totalorder %s21, 1
          %s184 = scalar_select %p183, %s21, 1
          %s185 = smul.addr %s182, 2
          %s186 = sadd.s32 %s184, %s185
          %s187 = smul.addr %s186, 4
          %s188 = scalar_lea.vmem %s0, %s187
        $region28: #{tpu_custom_call.1} parent=23 // pred_fallthru
          _
        // Predicated region
        $region29: #{tpu_custom_call.1} parent=23 // pred_check
          %p189 = pneg %p77
        $region30: #{tpu_custom_call.1} parent=23 // pred_check_branch
          %191 = sbr.rel (%p189) target = $region32
        $region31: #{tpu_custom_call.1} parent=23 // pred_region
          %s192 = sadd.s32 %s21, 1
          %p193 = scmp.lt.s32.totalorder %s20, 1
          %s194 = scalar_select %p193, %s20, 1
          %p195 = scmp.lt.s32.totalorder %s192, 1
          %s196 = scalar_select %p195, %s192, 1
          %s197 = smul.addr %s194, 2
          %s198 = sadd.s32 %s196, %s197
          %s199 = smul.addr %s198, 4
          %s200 = scalar_lea.vmem %s1, %s199
          %s201 = sadd.s32 %s21, 1
        $region32: #{tpu_custom_call.1} parent=23 // pred_fallthru
          _
      $region24: #{tpu_custom_call.1} parent=5 // pred_fallthru
        _
      %p202 = scmp.le.s32.totalorder 1, %s13
      %p203 = scmp.lt.s32.totalorder %s13, 3
      %p204 = pnand %p202, %p203
      %p205 = pneg %p204
      // Predicated region
      $region33: #{tpu_custom_call.1} parent=5 // pred_check
        _
      $region34: #{tpu_custom_call.1} parent=5 // pred_check_branch
        %207 = sbr.rel (%p204) target = $region36
      $region35: #{tpu_custom_call.1} parent=5 // pred_region
        %s208 = ssub.s32 %s13, 1
        %p209 = scmp.lt.s32.totalorder %s22, 1
        %s210 = scalar_select %p209, %s22, 1
        %p211 = scmp.lt.s32.totalorder %s23, 1
        %s212 = scalar_select %p211, %s23, 1
        %s213 = smul.addr %s210, 2
        %s214 = sadd.s32 %s212, %s213
        %s215 = smul.addr %s214, 4
        %s216 = scalar_lea.vmem %s0, %s215
        %p217 = pneg %p53
        %p218 = pneg %p50
        %s219 = sadd.s32 %s23, 1
        %p220 = scmp.lt.s32.totalorder %s22, 1
        %s221 = scalar_select %p220, %s22, 1
        %p222 = scmp.lt.s32.totalorder %s219, 1
        %s223 = scalar_select %p222, %s219, 1
        %s224 = smul.addr %s221, 2
        %s225 = sadd.s32 %s223, %s224
        %s226 = smul.addr %s225, 4
        %s227 = scalar_lea.vmem %s1, %s226
        %p228 = pneg %p83
        %p229 = pneg %p80
        %p230 = pneg %p104
        %p231 = pneg %p101
        %p232 = pneg %p125
        %p233 = pneg %p122
        %p234 = pneg %p153
        %p235 = pneg %p150
        %s236 = sand.u32 %s140, 1
        %s237 = scalar_lea.sflag [#allocation5], %s236
        %s238 = sand.u32 %s140, 1
        %s239 = smul.addr %s238, 8
        %s240 = scalar_lea.vmem [#allocation4], %s239
        %p241 = scmp.lt.s32.totalorder %s22, 1
        %s242 = scalar_select %p241, %s22, 1
        %p243 = scmp.lt.s32.totalorder %s23, 1
        %s244 = scalar_select %p243, %s23, 1
        %s245 = smul.addr %s242, 2
        %s246 = sadd.s32 %s244, %s245
        %s247 = smul.addr %s246, 4
        %s248 = scalar_lea.vmem %s0, %s247
        %s249 = sadd.s32 %s23, 1
        %p250 = scmp.lt.s32.totalorder %s22, 1
        %s251 = scalar_select %p250, %s22, 1
        %p252 = scmp.lt.s32.totalorder %s249, 1
        %s253 = scalar_select %p252, %s249, 1
        %s254 = smul.addr %s251, 2
        %s255 = sadd.s32 %s253, %s254
        %s256 = smul.addr %s255, 4
        %s257 = scalar_lea.vmem %s1, %s256
        %s258 = sadd.s32 %s23, 1
        %v260 = vld [vmem:[%s248] sm:$0xf]
        %v261 = vunpack.c.l.bf16 %v260
        %vm262 = vcmask 261120
        %263 = vst.msk [vmem:[#allocation2] sm:$0xff] %vm262, %v261
        %v264 = vld [vmem:[%s257] sm:$0xf]
        %v265 = vunpack.c.l.bf16 %v264
        %266 = vst.msk [vmem:[#allocation2 + $0x8] sm:$0xff] %vm262, %v265
        %v267 = vld [vmem:[#allocation2] sm:$0xff]
        %v268 = vpack.c.bf16 %v267, %v267
        %vm269 = vcmask 257024
        %270 = vst.msk [vmem:[#allocation3] sm:$0xf] %vm269, %v268
        %v271 = vld [vmem:[#allocation2 + $0x1] sm:$0xff]
        %v272 = vpack.c.bf16 %v271, %v271
        %v274 = vunpack.c.l.b16 %v272
        %v275 = vpack.c.b16 %v274, %v274
        %276 = vrot.lane.b32.xlu0 %v275, 32
        %v277 = vpop.permute.xlu0 %276
        %vm279 = vcmask 519424
        %280 = vst.msk [vmem:[#allocation3] sm:$0xf] %vm279, %v277
        %v281 = vld [vmem:[#allocation2 + $0x2] sm:$0xff]
        %v282 = vpack.c.bf16 %v281, %v281
        %v284 = vunpack.c.l.b16 %v282
        %v285 = vpack.c.b16 %v284, %v284
        %286 = vrot.lane.b32.xlu0 %v285, 64
        %v287 = vpop.permute.xlu0 %286
        %vm289 = vcmask 781824
        %290 = vst.msk [vmem:[#allocation3] sm:$0xf] %vm289, %v287
        %v291 = vld [vmem:[#allocation2 + $0x3] sm:$0xff]
        %v292 = vpack.c.bf16 %v291, %v291
        %v294 = vunpack.c.l.b16 %v292
        %v295 = vpack.c.b16 %v294, %v294
        %296 = vrot.lane.b32.xlu0 %v295, 96
        %v297 = vpop.permute.xlu0 %296
        %vm299 = vcmask 1044224
        %300 = vst.msk [vmem:[#allocation3] sm:$0xf] %vm299, %v297
        %v301 = vld [vmem:[#allocation2 + $0x4] sm:$0xff]
        %v302 = vpack.c.bf16 %v301, %v301
        %303 = vst.msk [vmem:[#allocation3 + $0x4] sm:$0xf] %vm269, %v302
        %v304 = vld [vmem:[#allocation3] sm:$0xff]
        %v305 = vld [vmem:[%s2] sm:$0xf]
        %v306 = vld [vmem:[%s2 + $0x4] sm:$0xf]
        %v307 = vld [vmem:[%s2 + $0x8] sm:$0xf]
        %v308 = vld [vmem:[%s2 + $0xc] sm:$0xf]
        %v309 = vld [vmem:[%s2 + $0x10] sm:$0xf]
        %v310 = vld [vmem:[%s2 + $0x14] sm:$0xf]
        %v311 = vld [vmem:[%s2 + $0x18] sm:$0xf]
        %v312 = vld [vmem:[%s2 + $0x1c] sm:$0xf]
        %v313 = vld [vmem:[%s2 + $0x20] sm:$0xf]
        %v314 = vld [vmem:[%s2 + $0x24] sm:$0xf]
        %v315 = vld [vmem:[%s2 + $0x28] sm:$0xf]
        %v316 = vld [vmem:[%s2 + $0x2c] sm:$0xf]
        %v317 = vld [vmem:[%s2 + $0x30] sm:$0xf]
        %v318 = vld [vmem:[%s2 + $0x34] sm:$0xf]
        %v319 = vld [vmem:[%s2 + $0x38] sm:$0xf]
        %v320 = vld [vmem:[%s2 + $0x3c] sm:$0xf]
        %v321 = vld [vmem:[%s2 + $0x40] sm:$0xf]
        %v322 = vld [vmem:[%s2 + $0x44] sm:$0xf]
        %v323 = vld [vmem:[%s2 + $0x48] sm:$0xf]
        %v324 = vld [vmem:[%s2 + $0x4c] sm:$0xf]
        %v325 = vld [vmem:[%s3] sm:$0x1]
        %v327 = vlaneseq
        %v328 = vshrl.u32 %v327, 7
        %v329 = vsub.s32 0, %v328
        %v330 = vrot.slane %v325, %v329
        %v333 = vunpack.c.l.b16 %v304
        %v334 = vunpack.c.h.b16 %v304
        %v335 = vpack.c.b16 %v333, %v333
        %v336 = vpack.c.b16 %v334, %v334
        %v358 = vunpack.c.l.b16 %v305
        %v359 = vunpack.c.l.b16 %v306
        %v360 = vunpack.c.l.b16 %v307
        %v361 = vunpack.c.l.b16 %v308
        %v362 = vunpack.c.l.b16 %v309
        %v363 = vunpack.c.l.b16 %v310
        %v364 = vunpack.c.l.b16 %v311
        %v365 = vunpack.c.l.b16 %v312
        %v366 = vunpack.c.l.b16 %v313
        %v367 = vunpack.c.l.b16 %v314
        %v368 = vunpack.c.l.b16 %v315
        %v369 = vunpack.c.l.b16 %v316
        %v370 = vunpack.c.l.b16 %v317
        %v371 = vunpack.c.l.b16 %v318
        %v372 = vunpack.c.l.b16 %v319
        %v373 = vunpack.c.l.b16 %v320
        %v374 = vunpack.c.l.b16 %v321
        %v375 = vunpack.c.l.b16 %v322
        %v376 = vunpack.c.l.b16 %v323
        %v377 = vunpack.c.l.b16 %v324
        %v378 = vpack.c.b16 %v359, %v358
        %v379 = vpack.c.b16 %v361, %v360
        %v380 = vpack.c.b16 %v363, %v362
        %v381 = vpack.c.b16 %v365, %v364
        %v382 = vpack.c.b16 %v367, %v366
        %v383 = vpack.c.b16 %v369, %v368
        %v384 = vpack.c.b16 %v371, %v370
        %v385 = vpack.c.b16 %v373, %v372
        %v386 = vpack.c.b16 %v375, %v374
        %v387 = vpack.c.b16 %v377, %v376
        %v399 = vsel %vm262, %v336, 0
        %401 = vmatprep.subr.bf16.mxu0 0
        %402 = vmatpush1.bf16.msra.mxu0 %v385
        %403 = vmatprep.subr.bf16.mxu0 0
        %404 = vmatpush1.bf16.msra.mxu0 %v384
        %405 = vmatprep.subr.bf16.mxu0 0
        %406 = vmatpush1.bf16.msra.mxu0 %v383
        %407 = vmatprep.subr.bf16.mxu0 0
        %408 = vmatpush1.bf16.msra.mxu0 %v382
        %409 = vmatprep.subr.bf16.mxu0 0
        %410 = vmatpush1.bf16.msra.mxu0 %v381
        %411 = vmatprep.subr.bf16.mxu0 0
        %412 = vmatpush1.bf16.msra.mxu0 %v380
        %413 = vmatprep.subr.bf16.mxu0 0
        %414 = vmatpush1.bf16.msra.mxu0 %v379
        %415 = vmatprep.subr.bf16.mxu0 0
        %416 = vmatpush1.bf16.msra.mxu0 %v378
        %417 = vmatprep.subr.bf16.mxu0 0
        %418 = vmatpush2.bf16.msra.mxu0 0
        %419 = vmatprep.subr.bf16.mxu0 0
        %420 = vmatpush2.bf16.msra.mxu0 0
        %421 = vmatprep.subr.bf16.mxu0 0
        %422 = vmatpush2.bf16.msra.mxu0 0
        %423 = vmatprep.subr.bf16.mxu0 0
        %424 = vmatpush2.bf16.msra.mxu0 0
        %425 = vmatprep.subr.bf16.mxu0 0
        %426 = vmatpush2.bf16.msra.mxu0 0
        %427 = vmatprep.subr.bf16.mxu0 0
        %428 = vmatpush2.bf16.msra.mxu0 0
        %429 = vmatprep.subr.bf16.mxu0 0
        %430 = vmatpush2.bf16.msra.mxu0 %v387
        %431 = vmatprep.subr.bf16.mxu0 0
        %432 = vmatpush2.bf16.msra.mxu0 %v386
        %433 = vmatprep.mubr.bf16.mxu0 %v399
        %434 = vmatmul.mubr.bf16.gmra.mxu0 %v335
        %v435 = vpop.f32.mrf.mxu0
        %v436 = vadd.f32 %v330, %v435
        %v437 = vpop.f32.mrf.mxu0
        %v438 = vpop.f32.mrf.mxu0
        %v439 = vpop.f32.mrf.mxu0
        %440 = vdwg.mxu0
        %v441 = vsub.f32 0.0, %v436
        %v442 = vmul.f32 %v441, 1.442695
        %v443 = vpow.pop %v442
        %v444 = vadd.f32 %v443, 1.0
        %v445 = vrcp.pop %v444
        %447 = vrot.lane.b32.xlu0 %v445, 96
        %v448 = vpop.permute.xlu0 %447
        %v450 = vmul.f32 %v436, %v448
        %451 = vst.msk [vmem:[%s240] sm:$0xff] %vm262, %v450
        %s452 = sand.u32 %s140, 1
        %s453 = scalar_lea.sflag [#allocation5], %s452
        %s454 = sand.u32 %s140, 1
        %s455 = smul.addr %s454, 8
        %s456 = scalar_lea.vmem [#allocation4], %s455
        // Predicated region
        $region37: #{tpu_custom_call.1} parent=35 // pred_check
          %p457 = pneg %p150
        $region38: #{tpu_custom_call.1} parent=35 // pred_check_branch
          %459 = sbr.rel (%p457) target = $region40
        $region39: #{tpu_custom_call.1} parent=35 // pred_region
          %s461 = ssub.s32 128, 128
          %462 = vsyncadd %s453, %s461
          %s463 = sadd.s32 %s23, %s22
          %s464 = smul.addr %s463, 128
          %s465 = scalar_lea.hbm %s4, %s464
          %s467 = sshll.u32 %s456, 4
          %s468 = int_to_ptr.vmem [resolvable:$true] %s467
          %470 = dma.vmem_to_hbm [thread:$0]  %s468, 128, %s465, %s453
        $region40: #{tpu_custom_call.1} parent=35 // pred_fallthru
          _
      $region36: #{tpu_custom_call.1} parent=5 // pred_fallthru
        _
      %p471 = scmp.le.s32.totalorder 2, %s13
      // Predicated region
      $region41: #{tpu_custom_call.1} parent=5 // pred_check
        %p472 = pneg %p471
      $region42: #{tpu_custom_call.1} parent=5 // pred_check_branch
        %474 = sbr.rel (%p472) target = $region44
      $region43: #{tpu_custom_call.1} parent=5 // pred_region
        %s475 = ssub.s32 %s13, 2
        // Predicated region
        $region45: #{tpu_custom_call.1} parent=43 // pred_check
          %p476 = pneg %p156
        $region46: #{tpu_custom_call.1} parent=43 // pred_check_branch
          %478 = sbr.rel (%p476) target = $region48
        $region47: #{tpu_custom_call.1} parent=43 // pred_region
          %s479 = sand.u32 %s141, 1
          %s480 = scalar_lea.sflag [#allocation5], %s479
          %s481 = sand.u32 %s141, 1
          %s482 = smul.addr %s481, 8
          %s483 = scalar_lea.vmem [#allocation4], %s482
          %484 = dma.done %s480, 128
        $region48: #{tpu_custom_call.1} parent=43 // pred_fallthru
          _
      $region44: #{tpu_custom_call.1} parent=5 // pred_fallthru
        _
    $region6: #{tpu_custom_call.1} parent=1 // loop_footer
      %s17 = sadd.s32 1, %s13
    $region7: #{tpu_custom_call.1} parent=1 // loop_footer_branch
      %12 = sbr.rel target = $region3
    $region8: #{tpu_custom_call.1} parent=1 // loop_exit
      _
    %485 = vsyncpa [#allocation5], 1
    %s486 = scalar_lea.sflag [#allocation5], 1
    %487 = vsyncpa %s486, 1

</llo_original>
